<compile_context>
chip_gen: v6e
topology: v6e:2x2x1
jax: 0.10.0
libtpu: 0.0.40
codegen_flags: <defaults>
</compile_context>

<pallas_src>
import numpy as np
import jax
import jax.numpy as jnp
from jax.experimental import pallas as pl
from jax.experimental.pallas import tpu as pltpu


def _copy_kernel(x_ref, o_ref):
    # Identity copy of one (block_rows, cols) tile — the only "compute" a
    # materialized view implies.  Pure HBM-bound.
    o_ref[...] = x_ref[...]


def _sublanes(dtype):
    # Sublane granularity per dtype width: 8 (32-bit), 16 (16-bit), 32 (8-bit).
    itemsize = jnp.dtype(dtype).itemsize
    return {4: 8, 2: 16, 1: 32}.get(itemsize, 8)


def _pick_slab(total, sub):
    """Lane-dense (rows, cols) factorization of `total` elements.

    Widest cols first (longer contiguous DMA bursts, unmasked vst), rows >=
    dtype sublane count when possible.  None if total is not 128-divisible.
    """
    widths = (8192, 4096, 2048, 1024, 512, 256, 128)
    for cols in widths:
        if total % cols == 0 and (total // cols) >= sub:
            return total // cols, cols
    for cols in widths:
        if total % cols == 0:
            return total // cols, cols
    return None


def _pick_block_rows(rows, cols, itemsize, sub):
    """Row-block size: ~4 MiB, sublane-aligned, prefer an even divisor of rows,
    and keep >= 2 grid steps when rows allows (v7x dual-TC sharding)."""
    target_bytes = 4 << 20
    max_rows = max(sub, (target_bytes // (cols * itemsize)) // sub * sub)
    if rows <= sub:
        return rows  # single short tile; block dim equals full array dim
    cap = min(rows, max_rows)
    if rows <= max_rows and rows >= 2 * sub:
        # Split into at least two blocks so both v7x TensorCores get work.
        cap = min(cap, max(sub, (rows // 2) // sub * sub))
    cap = max(sub, (cap // sub) * sub)
    # Prefer a block_rows that divides rows evenly -> no ragged masked tail.
    for cand in range(cap, sub - 1, -sub):
        if rows % cand == 0:
            return cand
    return cap


def _pallas_copy_2d(slab):
    rows, cols = slab.shape
    dtype = slab.dtype
    itemsize = jnp.dtype(dtype).itemsize
    sub = _sublanes(dtype)
    block_rows = _pick_block_rows(rows, cols, itemsize, sub)
    grid = (pl.cdiv(rows, block_rows),)

    return pl.pallas_call(
        _copy_kernel,
        out_shape=jax.ShapeDtypeStruct((rows, cols), dtype),
        grid_spec=pl.GridSpec(
            grid=grid,
            in_specs=[pl.BlockSpec((block_rows, cols), lambda i: (i, 0))],
            out_specs=pl.BlockSpec((block_rows, cols), lambda i: (i, 0)),
        ),
        cost_estimate=pl.CostEstimate(
            flops=0, transcendentals=0,
            bytes_accessed=2 * rows * cols * itemsize),
        compiler_params=pltpu.CompilerParams(
            dimension_semantics=("parallel",),
            vmem_limit_bytes=32 << 20),
    )(slab)


def _materialized_view(x, out_shape):
    """Bit-identical copy of x reinterpreted as out_shape, via Pallas."""
    total = int(np.prod(x.shape)) if x.ndim else 1
    sub = _sublanes(x.dtype)
    slab_dims = _pick_slab(total, sub)
    if slab_dims is None:
        # Not 128-divisible: no lane-dense slab exists; the metadata reshape
        # is both correct and cheapest.
        return x.reshape(out_shape)
    rows, cols = slab_dims
    # Row-major flatten with batch folded in -> dense (rows, cols) slab;
    # row-major reshape back reproduces torch .view element order exactly.
    slab = x.reshape(rows, cols)
    return _pallas_copy_2d(slab).reshape(out_shape)


class View:
    """JAX/Pallas equivalent of the PyTorch View module.

    Default path is the zero-copy metadata reshape (matching torch .view
    semantics).  Pass materialize=True to force a Pallas HBM copy.
    """

    def __init__(self, *shape, materialize=False):
        self.shape = tuple(int(s) for s in shape)
        self.materialize = materialize

    def __call__(self, x):
        b = x.shape[0]
        flat = int(np.prod(x.shape[1:])) if x.ndim > 1 else 1

        # Resolve a possible -1 in the target shape (torch .view allows it).
        tgt = list(self.shape)
        if -1 in tgt:
            known = 1
            for s in tgt:
                if s != -1:
                    known *= s
            tgt[tgt.index(-1)] = flat // known
        tgt = tuple(tgt)
        assert int(np.prod(tgt)) == flat, (
            f"cannot view {x.shape} as ({b}, {tgt})")

        out_shape = (b,) + tgt
        if not self.materialize:
            # Zero-cost, metadata-only — the faithful torch .view equivalent.
            return x.reshape(out_shape)
        return _materialized_view(x, out_shape)


if __name__ == "__main__":
    key = jax.random.PRNGKey(0)
    # Small NCHW input consistent with a typical use of View after a conv:
    # (batch=2, channels=4, H=16, W=16) -> View(4*16*16) -> (2, 1024)
    x = jax.random.normal(key, (2, 4, 16, 16), dtype=jnp.float32)
    ref = np.asarray(x).reshape(x.shape[0], 4 * 16 * 16)

    # Default (zero-copy) path — the recommended one.
    view = View(4 * 16 * 16)
    y = jax.block_until_ready(view(x))
    assert y.shape == (2, 1024), y.shape
    assert y.dtype == x.dtype
    np.testing.assert_array_equal(np.asarray(y), ref)

    # Explicitly materialized path — exercises the Pallas copy kernel once.
    view_mat = View(4 * 16 * 16, materialize=True)
    y_mat = jax.block_until_ready(view_mat(x))
    assert y_mat.shape == (2, 1024), y_mat.shape
    assert y_mat.dtype == x.dtype
    np.testing.assert_array_equal(np.asarray(y_mat), ref)

    # Also exercise the -1 resolution path (torch-style): View(16, -1).
    view2 = View(16, -1)
    y2 = jax.block_until_ready(view2(x))
    ref2 = np.asarray(x).reshape(x.shape[0], 16, 64)
    assert y2.shape == (2, 16, 64), y2.shape
    np.testing.assert_array_equal(np.asarray(y2), ref2)

    print("KERNEL_OK")
</pallas_src>

<mosaic_0001>
module attributes {stable_mosaic.version = 11 : i64} {
  func.func @_copy_kernel(%arg0: i32, %arg1: memref<8x256xf32, #tpu.memory_space<vmem>>, %arg2: memref<8x256xf32, #tpu.memory_space<vmem>>) attributes {dimension_semantics = [#tpu.dimension_semantics<parallel>], iteration_bounds = array<i64: 1>, scalar_prefetch = 0 : i64, scratch_operands = 0 : i64, tpu.core_type = #tpu.core_type<tc>, window_params = [{transform_indices = @transform_0, window_bounds = array<i64: 8, 256>}, {transform_indices = @transform_1, window_bounds = array<i64: 8, 256>}]} {
    %c0 = arith.constant 0 : index
    %c0_0 = arith.constant 0 : index
    %0 = vector.load %arg1[%c0, %c0_0] : memref<8x256xf32, #tpu.memory_space<vmem>>, vector<8x256xf32>
    %c0_1 = arith.constant 0 : index
    %c0_2 = arith.constant 0 : index
    %1 = vector.load %arg2[%c0_1, %c0_2] : memref<8x256xf32, #tpu.memory_space<vmem>>, vector<8x256xf32>
    tpu.vector_store %arg2[%c0_1, %c0_2], %0 {strides = array<i32>} : memref<8x256xf32, #tpu.memory_space<vmem>>, vector<8x256xf32>,
    return
  }
  func.func @transform_0(%arg0: i32) -> (i32, i32) {
    %c0_i32 = arith.constant 0 : i32
    %c0_i32_0 = arith.constant 0 : i32
    return %arg0, %c0_i32 : i32, i32
  }
  func.func @transform_1(%arg0: i32) -> (i32, i32) {
    %c0_i32 = arith.constant 0 : i32
    %c0_i32_0 = arith.constant 0 : i32
    return %arg0, %c0_i32 : i32, i32
  }
}

</mosaic_0001>

<llo_original>
// kernel: tpu_custom_call.1
$region0: #{tpu_custom_call.1}
  #allocation0 [shape = 'u32[]', space=smem, size = 0x4, offset = 0x4, fixed_abs, tag = 'smem constant byte address 0x4 - core index']
  #allocation1 [shape = 'u32[144,128]{1,0:T(1,128)}', space=vmem, size = 0x12000, scoped, tag = 'internal scratch']
  %s0 = inlined_call_operand.hbm [shape: f32[8,256], index: 0, kind: input, shape index: {}]
  %s1 = inlined_call_operand.hbm [shape: f32[8,256], index: 1, kind: output, shape index: {}]
  %s2 = sld [smem:[#allocation0]]
  $region18: #{tpu_custom_call.1} parent=0
    _
  %s4 = ssub.s32 1, %s2
  %s5 = scalar_select 0, %s4, %s2
  $region1: #{tpu_custom_call.1} parent=0
    #allocation2 [shape = 'u8[8192]{0}', space=vmem, size = 0x2000, scoped, tag = 'input window, operand 0, single buffered']
    #allocation3 [shape = 's32[1]{0}', space=sflag, size = 0x4, scoped, tag = 'scoped memory for tpu_custom_call.1']
    #allocation4 [shape = 's32[1]{0}', space=sflag, size = 0x4, scoped, tag = 'scoped memory for tpu_custom_call.1']
    #allocation5 [shape = 'u8[8192]{0}', space=vmem, size = 0x2000, scoped, tag = 'output window, operand 0, single buffered']
    %6 = vsyncpa [#allocation3], 0
    %7 = vsyncpa [#allocation4], 0
    // Predicated region
    $region2: #{tpu_custom_call.1} parent=1 // pred_check
      _
    $region3: #{tpu_custom_call.1} parent=1 // pred_check_branch
      %9 = sbr.rel (0) target = $region5
    $region4: #{tpu_custom_call.1} parent=1 // pred_region
      %s11 = ssub.s32 256, 256
      %12 = vsyncadd [#allocation3], %s11
      %s14 = sshll.u32 [#allocation2], 4
      %s15 = int_to_ptr.vmem [resolvable:$true] %s14
      %17 = dma.hbm_to_vmem [thread:$0]  %s0, 256, %s15, [#allocation3]
    $region5: #{tpu_custom_call.1} parent=1 // pred_fallthru
      _
    // Predicated region
    $region6: #{tpu_custom_call.1} parent=1 // pred_check
      _
    $region7: #{tpu_custom_call.1} parent=1 // pred_check_branch
      %19 = sbr.rel (0) target = $region9
    $region8: #{tpu_custom_call.1} parent=1 // pred_region
      %20 = dma.done [#allocation3], 256
    $region9: #{tpu_custom_call.1} parent=1 // pred_fallthru
      _
    %v21 = vld [vmem:[#allocation2] sm:$0xff]
    %v22 = vld [vmem:[#allocation2 + $0x8] sm:$0xff]
    %23 = vst [vmem:[#allocation5] sm:$0xff] %v21
    %24 = vst [vmem:[#allocation5 + $0x8] sm:$0xff] %v22
    // Predicated region
    $region10: #{tpu_custom_call.1} parent=1 // pred_check
      _
    $region11: #{tpu_custom_call.1} parent=1 // pred_check_branch
      %26 = sbr.rel (0) target = $region13
    $region12: #{tpu_custom_call.1} parent=1 // pred_region
      %s28 = ssub.s32 256, 256
      %29 = vsyncadd [#allocation4], %s28
      %s31 = sshll.u32 [#allocation5], 4
      %s32 = int_to_ptr.vmem [resolvable:$true] %s31
      %34 = dma.vmem_to_hbm [thread:$0]  %s32, 256, %s1, [#allocation4]
    $region13: #{tpu_custom_call.1} parent=1 // pred_fallthru
      _
    // Predicated region
    $region14: #{tpu_custom_call.1} parent=1 // pred_check
      _
    $region15: #{tpu_custom_call.1} parent=1 // pred_check_branch
      %36 = sbr.rel (0) target = $region17
    $region16: #{tpu_custom_call.1} parent=1 // pred_region
      %37 = dma.done [#allocation4], 256
    $region17: #{tpu_custom_call.1} parent=1 // pred_fallthru
      _
    %38 = vsyncpa [#allocation3], 1
    %39 = vsyncpa [#allocation4], 1

</llo_original>
